<compile_context>
chip_gen: v6e
topology: v6e:2x2x1
jax: 0.10.0
libtpu: 0.0.40
codegen_flags: <defaults>
</compile_context>

<pallas_src>
import functools

import jax
import jax.numpy as jnp
from jax.experimental import pallas as pl
from jax.experimental.pallas import tpu as pltpu

_LANES = 128       # lane width (pad narrow outputs up to this)
_SUBLANES = 8      # sublane width (batch tiles / sequence padding granularity)


def _round_up(n, m):
    return (n + m - 1) // m * m


def _pad_to(x, axis, target):
    pad = target - x.shape[axis]
    if pad <= 0:
        return x
    widths = [(0, 0)] * x.ndim
    widths[axis] = (0, pad)
    return jnp.pad(x, widths)


def _vmem_budget_bytes():
    """Generation-aware scoped-VMEM budget (v5e/v6e: 128 MiB phys -> ~96 MiB,
    v7x: 64 MiB phys -> ~48 MiB).  Falls back to the smallest generation."""
    try:
        cap = int(pltpu.get_tpu_info().vmem_capacity_bytes)
    except Exception:                 # query unavailable -> assume v7x (64 MiB)
        cap = 64 * 1024 * 1024
    return max(32 * 1024 * 1024, min(cap * 3 // 4, 100 * 1024 * 1024))


def _batch_tile(batch, cap=256):
    """Batch rows per grid step: as large as `cap`, but keep >=2 grid steps when the
    padded batch allows so both v7x TensorCores get work under megacore sharding."""
    b8 = _round_up(batch, _SUBLANES)
    tb = min(cap, b8)
    if b8 >= 2 * _SUBLANES:
        tb = min(tb, max(_SUBLANES, (b8 // 2) // _SUBLANES * _SUBLANES))
    return tb


def _encoder_tile(batch, seq, h_in, h_out, budget):
    """Largest encoder batch tile whose double-buffered blocks + f32 intermediates fit
    in ~60% of the scoped-VMEM budget."""
    fixed = h_in * h_out * 2 * 2 + h_out * 4 * 2            # weight + bias (dbl-buffered)
    per_row = (seq * h_in * 2 * 2                            # emb block (bf16, dbl buf)
               + seq * 4 * 2                                  # mask block (f32, dbl buf)
               + seq * h_out * 4                              # f32 hidden intermediate
               + seq * h_out * 2                              # bf16 slack for MXU feed
               + h_out * 4 * 2)                               # output block (dbl buf)
    avail = int(budget * 0.6) - fixed
    fit = max(_SUBLANES, (avail // max(per_row, 1)) // _SUBLANES * _SUBLANES)
    return min(fit, _batch_tile(batch, cap=256))


# -----------------------------------------------------------------------------
# Kernel 1: synthetic encoder dense + GELU + masked mean pooling, TB rows / step.
#   out[t] = sum_s( gelu(emb[t] @ W + bias)[s] * mask[t,s] ) / max(sum_s mask[t,s], 1)
# -----------------------------------------------------------------------------
def _encode_pool_kernel(emb_ref, mask_ref, w_ref, b_ref, out_ref):
    tb, s, h = emb_ref.shape
    # Per-token dense on the MXU: (TB*S, H) @ (H, Hp), bf16 x bf16 -> f32 accumulate.
    # S is padded to a multiple of 8 in the wrapper, so this collapse is layout-free.
    x = emb_ref[...].reshape(tb * s, h)
    hid = jnp.dot(x, w_ref[...], preferred_element_type=jnp.float32) + b_ref[...]
    # Synthetic "last_hidden_state"; tanh-approx GELU (encoder is a stand-in).
    hid = jax.nn.gelu(hid)
    hid = hid.reshape(tb, s, -1)                             # (TB, S, Hp) f32

    m = mask_ref[...]                                        # (TB, S) f32, lane-dense
    # Masked mean pooling on VPU (multiply) + XLU (sublane reduce over S); these slots
    # are idle while the MXU runs the next tile's dense matmul -> effectively free.
    num = jnp.sum(hid * m[:, :, None], axis=1)               # (TB, Hp)
    den = jnp.maximum(jnp.sum(m, axis=1, keepdims=True), 1.0)   # clamp all-zero masks
    out_ref[...] = (num / den).astype(out_ref.dtype)


def masked_mean_encode(emb, mask, w, b):
    """emb: (B,S,H) bf16, mask: (B,S) {0,1}, w: (H,H) bf16, b: (1,H) f32 -> (B,H) f32."""
    B, S, H = emb.shape
    Hp = _round_up(H, _LANES)           # lane-dense output width
    Sp = _round_up(S, _SUBLANES)        # keep the in-kernel reshape layout-free
    budget = _vmem_budget_bytes()
    tb = _encoder_tile(B, Sp, H, Hp, budget)
    Bp = _round_up(B, tb)

    emb_p = _pad_to(_pad_to(emb, 1, Sp), 0, Bp)                       # zero rows -> 0
    mask_p = _pad_to(_pad_to(mask.astype(jnp.float32), 1, Sp), 0, Bp)  # (Bp, Sp)
    w_p = _pad_to(w, 1, Hp)             # zero pad cols -> exact zeros in pad lanes
    b_p = _pad_to(b, 1, Hp)

    out = pl.pallas_call(
        _encode_pool_kernel,
        out_shape=jax.ShapeDtypeStruct((Bp, Hp), jnp.float32),
        grid=(Bp // tb,),
        in_specs=[
            pl.BlockSpec((tb, Sp, H), lambda i: (i, 0, 0)),
            pl.BlockSpec((tb, Sp), lambda i: (i, 0)),
            pl.BlockSpec((H, Hp), lambda i: (0, 0)),
            pl.BlockSpec((1, Hp), lambda i: (0, 0)),
        ],
        out_specs=pl.BlockSpec((tb, Hp), lambda i: (i, 0)),
        compiler_params=pltpu.CompilerParams(
            dimension_semantics=("parallel",),
            vmem_limit_bytes=budget,
        ),
    )(emb_p, mask_p, w_p, b_p)
    return out[:B, :H]


# -----------------------------------------------------------------------------
# Kernel 2 (fused heads): contrast_head (Linear -> ReLU -> Linear -> L2 normalize)
# and get_cluster_prob (Student-t soft assignment) share the same (TB, E) embedding
# block -> one pallas_call, one HBM read of the embeddings.
#   ||e - c||^2 = ||e||^2 + ||c||^2 - 2 e@c.T   (single MXU matmul, no (B,K,E) blowup)
# -----------------------------------------------------------------------------
def _heads_kernel(e_ref, w1_ref, b1_ref, w2_ref, b2_ref, ct_ref, csq_ref,
                  feat_ref, prob_ref, *, alpha, n_clusters):
    e = e_ref[...]                                            # (TB, E) f32

    # --- contrast_head ---
    h = jnp.dot(e.astype(jnp.bfloat16), w1_ref[...],
                preferred_element_type=jnp.float32) + b1_ref[...]
    h = jnp.maximum(h, 0.0)                                   # ReLU
    f = jnp.dot(h.astype(jnp.bfloat16), w2_ref[...],
                preferred_element_type=jnp.float32) + b2_ref[...]
    ss = jnp.sum(f * f, axis=-1, keepdims=True)
    feat_ref[...] = f * jax.lax.rsqrt(jnp.maximum(ss, 1e-24))  # F.normalize(dim=1)

    # --- get_cluster_prob (cross term kept f32 for nearly-equidistant centers) ---
    cross = jnp.dot(e, ct_ref[...], preferred_element_type=jnp.float32)   # (TB, Kp)
    e_sq = jnp.sum(e * e, axis=-1, keepdims=True)
    norm_sq = jnp.maximum(e_sq + csq_ref[...] - 2.0 * cross, 0.0)
    num = 1.0 / (1.0 + norm_sq / alpha)
    if alpha != 1.0:                                          # alpha==1 -> exponent is 1
        num = num ** ((alpha + 1.0) / 2.0)
    lane = jax.lax.broadcasted_iota(jnp.int32, num.shape, 1)
    num = jnp.where(lane < n_clusters, num, 0.0)              # mask lane-padded centers
    prob_ref[...] = num / jnp.sum(num, axis=-1, keepdims=True)


def sccl_heads(params, emb, alpha=1.0):
    """emb: (B, E) f32 -> (contrast feats (B, 128), cluster probs (B, K))."""
    B, E = emb.shape
    D = params["ch_w2"].shape[1]
    K = params["cluster_centers"].shape[0]
    Dp = _round_up(D, _LANES)
    Kp = _round_up(K, _LANES)
    budget = _vmem_budget_bytes()

    tb = _batch_tile(B, cap=256)        # whole (padded) batch per step at small B
    Bp = _round_up(B, tb)

    emb_p = _pad_to(emb, 0, Bp)
    w2_p = _pad_to(params["ch_w2"], 1, Dp)                    # lane-dense contrast output
    b2_p = _pad_to(params["ch_b2"], 1, Dp)
    c = _pad_to(params["cluster_centers"].astype(jnp.float32), 0, Kp)
    ct = c.T                                                  # (E, Kp): pre-transposed
    csq = jnp.sum(c * c, axis=-1)[None, :]                    # (1, Kp): ||c||^2

    feat, prob = pl.pallas_call(
        functools.partial(_heads_kernel, alpha=float(alpha), n_clusters=K),
        out_shape=(jax.ShapeDtypeStruct((Bp, Dp), jnp.float32),
                   jax.ShapeDtypeStruct((Bp, Kp), jnp.float32)),
        grid=(Bp // tb,),
        in_specs=[
            pl.BlockSpec((tb, E), lambda i: (i, 0)),
            pl.BlockSpec((E, E), lambda i: (0, 0)),
            pl.BlockSpec((1, E), lambda i: (0, 0)),
            pl.BlockSpec((E, Dp), lambda i: (0, 0)),
            pl.BlockSpec((1, Dp), lambda i: (0, 0)),
            pl.BlockSpec((E, Kp), lambda i: (0, 0)),
            pl.BlockSpec((1, Kp), lambda i: (0, 0)),
        ],
        out_specs=(pl.BlockSpec((tb, Dp), lambda i: (i, 0)),
                   pl.BlockSpec((tb, Kp), lambda i: (i, 0))),
        compiler_params=pltpu.CompilerParams(
            dimension_semantics=("parallel",),
            vmem_limit_bytes=budget,
        ),
    )(emb_p, params["ch_w1"], params["ch_b1"], w2_p, b2_p, ct, csq)
    return feat[:B, :D], prob[:B, :K]


def contrast_logits(params, embd1, embd2=None):
    """API parity with SCCLBert.contrast_logits (runs the fused heads kernel)."""
    f1, _ = sccl_heads(params, embd1)
    if embd2 is not None:
        f2, _ = sccl_heads(params, embd2)
        return f1, f2
    return f1


def get_cluster_prob(params, embeddings, alpha=1.0):
    """API parity with SCCLBert.get_cluster_prob (runs the fused heads kernel)."""
    _, p = sccl_heads(params, embeddings, alpha)
    return p


# -----------------------------------------------------------------------------
# SCCLBert-equivalent wrapper.
# -----------------------------------------------------------------------------
def init_params(key, vocab, hidden, contrast_dim, n_clusters):
    ks = jax.random.split(key, 7)
    s = 0.02
    return {
        "emb_table": (jax.random.normal(ks[0], (vocab, hidden), jnp.float32) * s
                      ).astype(jnp.bfloat16),
        "enc_w": (jax.random.normal(ks[1], (hidden, hidden), jnp.float32) * s
                  ).astype(jnp.bfloat16),
        "enc_b": jax.random.normal(ks[2], (1, hidden), jnp.float32) * s,
        "ch_w1": (jax.random.normal(ks[3], (hidden, hidden), jnp.float32) * s
                  ).astype(jnp.bfloat16),
        "ch_b1": jax.random.normal(ks[4], (1, hidden), jnp.float32) * s,
        "ch_w2": (jax.random.normal(ks[5], (hidden, contrast_dim), jnp.float32) * s
                  ).astype(jnp.bfloat16),
        "ch_b2": jnp.zeros((1, contrast_dim), jnp.float32),
        "cluster_centers": jax.random.normal(ks[6], (n_clusters, hidden), jnp.float32),
    }


def get_mean_embeddings(params, input_ids, attention_mask):
    # TODO(synk): token-embedding gather kept in plain JAX; fusing it into the encoder
    #             kernel needs a manual make_async_copy row-gather from an HBM-resident
    #             table (real BERT vocab tables do not fit in VMEM).
    emb = params["emb_table"][input_ids]                        # (B, S, H) bf16 gather
    return masked_mean_encode(emb, attention_mask, params["enc_w"], params["enc_b"])


def sccl_forward(params, input_ids, attention_mask, task_type="virtual"):
    if task_type == "evaluate":
        return get_mean_embeddings(params, input_ids, attention_mask)
    elif task_type == "virtual":
        # torch.unbind(x, dim=1) on (B, 2, S); fold both views into one (2B, S) batch ->
        # one pallas_call / pipeline (weights stay VMEM-resident, bigger parallel grid
        # for v7x's two TensorCores), then split.
        B = input_ids.shape[0]
        ids = jnp.concatenate([input_ids[:, 0, :], input_ids[:, 1, :]], axis=0)
        am = jnp.concatenate([attention_mask[:, 0, :], attention_mask[:, 1, :]], axis=0)
        mean = get_mean_embeddings(params, ids, am)
        return mean[:B], mean[B:]
    else:
        raise ValueError(f"unknown task_type: {task_type}")


# -----------------------------------------------------------------------------
# Plain-JAX references (for correctness checks only).
# -----------------------------------------------------------------------------
def _ref_mean_embeddings(params, ids, am):
    emb = params["emb_table"].astype(jnp.float32)[ids]
    h = emb @ params["enc_w"].astype(jnp.float32) + params["enc_b"]
    h = jax.nn.gelu(h)
    m = am.astype(jnp.float32)[..., None]
    return jnp.sum(h * m, axis=1) / jnp.maximum(jnp.sum(m, axis=1), 1.0)


def _ref_contrast(emb, params):
    h = jnp.maximum(emb @ params["ch_w1"].astype(jnp.float32) + params["ch_b1"], 0.0)
    f = h @ params["ch_w2"].astype(jnp.float32) + params["ch_b2"]
    n = jnp.sqrt(jnp.sum(f * f, axis=-1, keepdims=True))
    return f / jnp.maximum(n, 1e-12)


def _ref_cluster_prob(emb, centers, alpha=1.0):
    d2 = jnp.sum((emb[:, None, :] - centers[None, :, :]) ** 2, axis=-1)
    num = 1.0 / (1.0 + d2 / alpha)
    num = num ** ((alpha + 1.0) / 2.0)
    return num / jnp.sum(num, axis=1, keepdims=True)


if __name__ == "__main__":
    B, S, H = 2, 8, 32
    VOCAB, CONTRAST_DIM, N_CLUSTERS = 50, 128, 4

    key = jax.random.PRNGKey(0)
    pkey, ikey = jax.random.split(key)
    params = init_params(pkey, VOCAB, H, CONTRAST_DIM, N_CLUSTERS)

    # two augmented "views": input_ids (B, 2, S), attention_mask (B, 2, S)
    input_ids = jax.random.randint(ikey, (B, 2, S), 0, VOCAB, dtype=jnp.int32)
    attention_mask = jnp.concatenate(
        [jnp.ones((B, 2, 6), jnp.int32), jnp.zeros((B, 2, S - 6), jnp.int32)], axis=-1
    )

    # forward, task_type='virtual' (both views folded into one pallas_call)
    mean1, mean2 = sccl_forward(params, input_ids, attention_mask, task_type="virtual")
    # forward, task_type='evaluate' (single view)
    mean_eval = sccl_forward(params, input_ids[:, 0, :], attention_mask[:, 0, :],
                             task_type="evaluate")

    # module's auxiliary heads: contrast_head + get_cluster_prob fused in ONE kernel
    feat1, probs = sccl_heads(params, mean1, alpha=1.0)

    for x in (mean1, mean2, mean_eval, feat1, probs):
        jax.block_until_ready(x)

    # shape + numerical checks vs plain-JAX reference
    assert mean1.shape == (B, H) and mean2.shape == (B, H) and mean_eval.shape == (B, H)
    assert feat1.shape == (B, CONTRAST_DIM) and probs.shape == (B, N_CLUSTERS)

    ref_m1 = _ref_mean_embeddings(params, input_ids[:, 0, :], attention_mask[:, 0, :])
    ref_m2 = _ref_mean_embeddings(params, input_ids[:, 1, :], attention_mask[:, 1, :])
    ref_f1 = _ref_contrast(ref_m1, params)
    ref_p1 = _ref_cluster_prob(ref_m1, params["cluster_centers"], 1.0)

    assert bool(jnp.allclose(mean1, ref_m1, rtol=1e-2, atol=1e-3))
    assert bool(jnp.allclose(mean2, ref_m2, rtol=1e-2, atol=1e-3))
    assert bool(jnp.allclose(mean_eval, ref_m1, rtol=1e-2, atol=1e-3))
    assert bool(jnp.allclose(feat1, ref_f1, rtol=5e-2, atol=2e-2))
    assert bool(jnp.allclose(probs, ref_p1, rtol=1e-2, atol=1e-3))
    assert bool(jnp.all(jnp.isfinite(probs)))

    print("KERNEL_OK")
</pallas_src>

<mosaic_0001>
module attributes {stable_mosaic.version = 11 : i64} {
  func.func @_encode_pool_kernel(%arg0: i32, %arg1: memref<8x8x32xbf16, #tpu.memory_space<vmem>>, %arg2: memref<8x8xf32, #tpu.memory_space<vmem>>, %arg3: memref<32x128xbf16, #tpu.memory_space<vmem>>, %arg4: memref<1x128xf32, #tpu.memory_space<vmem>>, %arg5: memref<8x128xf32, #tpu.memory_space<vmem>>) attributes {dimension_semantics = [#tpu.dimension_semantics<parallel>], iteration_bounds = array<i64: 1>, scalar_prefetch = 0 : i64, scratch_operands = 0 : i64, tpu.core_type = #tpu.core_type<tc>, window_params = [{transform_indices = @transform_0, window_bounds = array<i64: 8, 8, 32>}, {transform_indices = @transform_1, window_bounds = array<i64: 8, 8>}, {pipeline_mode = #tpu.pipeline_mode<synchronous>, transform_indices = @transform_2, window_bounds = array<i64: 32, 128>}, {pipeline_mode = #tpu.pipeline_mode<synchronous>, transform_indices = @transform_3, window_bounds = array<i64: 1, 128>}, {transform_indices = @transform_4, window_bounds = array<i64: 8, 128>}]} {
    %c0 = arith.constant 0 : index
    %c0_0 = arith.constant 0 : index
    %c0_1 = arith.constant 0 : index
    %0 = vector.load %arg1[%c0, %c0_0, %c0_1] : memref<8x8x32xbf16, #tpu.memory_space<vmem>>, vector<8x8x32xbf16>
    %1 = vector.shape_cast %0 : vector<8x8x32xbf16> to vector<64x32xbf16>
    %c0_2 = arith.constant 0 : index
    %c0_3 = arith.constant 0 : index
    %2 = vector.load %arg3[%c0_2, %c0_3] : memref<32x128xbf16, #tpu.memory_space<vmem>>, vector<32x128xbf16>
    %cst = arith.constant dense<0.000000e+00> : vector<64x128xf32>
    %3 = tpu.matmul %1, %2, %cst {dimension_numbers = #tpu.dot_dimension_numbers<[1], [0], [0], [1], [0, 0, 1, 1], [], []>} : vector<64x32xbf16>, vector<32x128xbf16>, vector<64x128xf32> -> vector<64x128xf32>
    %c0_4 = arith.constant 0 : index
    %c0_5 = arith.constant 0 : index
    %4 = vector.load %arg4[%c0_4, %c0_5] : memref<1x128xf32, #tpu.memory_space<vmem>>, vector<1x128xf32>
    %5 = vector.broadcast %4 : vector<1x128xf32> to vector<64x128xf32>
    %6 = arith.addf %3, %5 : vector<64x128xf32>
    %7 = arith.mulf %6, %6 : vector<64x128xf32>
    %8 = arith.mulf %6, %7 : vector<64x128xf32>
    %cst_6 = arith.constant 4.471500e-02 : f32
    %9 = vector.broadcast %cst_6 : f32 to vector<64x128xf32>
    %10 = arith.mulf %9, %8 : vector<64x128xf32>
    %11 = arith.addf %6, %10 : vector<64x128xf32>
    %cst_7 = arith.constant 0.797884583 : f32
    %12 = vector.broadcast %cst_7 : f32 to vector<64x128xf32>
    %13 = arith.mulf %12, %11 : vector<64x128xf32>
    %14 = math.tanh %13 : vector<64x128xf32>
    %cst_8 = arith.constant 1.000000e+00 : f32
    %15 = vector.broadcast %cst_8 : f32 to vector<64x128xf32>
    %16 = arith.addf %15, %14 : vector<64x128xf32>
    %cst_9 = arith.constant 5.000000e-01 : f32
    %17 = vector.broadcast %cst_9 : f32 to vector<64x128xf32>
    %18 = arith.mulf %17, %16 : vector<64x128xf32>
    %19 = arith.mulf %6, %18 : vector<64x128xf32>
    %20 = vector.shape_cast %19 : vector<64x128xf32> to vector<8x8x128xf32>
    %c0_10 = arith.constant 0 : index
    %c0_11 = arith.constant 0 : index
    %21 = vector.load %arg2[%c0_10, %c0_11] : memref<8x8xf32, #tpu.memory_space<vmem>>, vector<8x8xf32>
    %22 = vector.shape_cast %21 : vector<8x8xf32> to vector<8x8x1xf32>
    %23 = vector.broadcast %22 : vector<8x8x1xf32> to vector<8x8x128xf32>
    %24 = arith.mulf %20, %23 : vector<8x8x128xf32>
    %cst_12 = arith.constant dense<0.000000e+00> : vector<8x128xf32>
    %25 = vector.multi_reduction <add>, %24, %cst_12 [1] : vector<8x8x128xf32> to vector<8x128xf32>
    %cst_13 = arith.constant dense<0.000000e+00> : vector<8xf32>
    %26 = vector.multi_reduction <add>, %21, %cst_13 [1] : vector<8x8xf32> to vector<8xf32>
    %27 = vector.shape_cast %26 : vector<8xf32> to vector<8x1xf32>
    %cst_14 = arith.constant 1.000000e+00 : f32
    %28 = vector.broadcast %cst_14 : f32 to vector<8x1xf32>
    %29 = arith.maximumf %27, %28 : vector<8x1xf32>
    %30 = vector.broadcast %29 : vector<8x1xf32> to vector<8x128xf32>
    %31 = arith.divf %25, %30 : vector<8x128xf32>
    %c0_15 = arith.constant 0 : index
    %c0_16 = arith.constant 0 : index
    %32 = vector.load %arg5[%c0_15, %c0_16] : memref<8x128xf32, #tpu.memory_space<vmem>>, vector<8x128xf32>
    tpu.vector_store %arg5[%c0_15, %c0_16], %31 {strides = array<i32>} : memref<8x128xf32, #tpu.memory_space<vmem>>, vector<8x128xf32>,
    return
  }
  func.func @transform_0(%arg0: i32) -> (i32, i32, i32) {
    %c0_i32 = arith.constant 0 : i32
    %c0_i32_0 = arith.constant 0 : i32
    %c0_i32_1 = arith.constant 0 : i32
    return %arg0, %c0_i32, %c0_i32_0 : i32, i32, i32
  }
  func.func @transform_1(%arg0: i32) -> (i32, i32) {
    %c0_i32 = arith.constant 0 : i32
    %c0_i32_0 = arith.constant 0 : i32
    return %arg0, %c0_i32 : i32, i32
  }
  func.func @transform_2(%arg0: i32) -> (i32, i32) {
    %c0_i32 = arith.constant 0 : i32
    %c0_i32_0 = arith.constant 0 : i32
    %c0_i32_1 = arith.constant 0 : i32
    return %c0_i32, %c0_i32_0 : i32, i32
  }
  func.func @transform_3(%arg0: i32) -> (i32, i32) {
    %c0_i32 = arith.constant 0 : i32
    %c0_i32_0 = arith.constant 0 : i32
    %c0_i32_1 = arith.constant 0 : i32
    return %c0_i32, %c0_i32_0 : i32, i32
  }
  func.func @transform_4(%arg0: i32) -> (i32, i32) {
    %c0_i32 = arith.constant 0 : i32
    %c0_i32_0 = arith.constant 0 : i32
    return %arg0, %c0_i32 : i32, i32
  }
}

</mosaic_0001>

<llo_original>
// kernel: tpu_custom_call.1
$region0: #{tpu_custom_call.1}
  #allocation0 [shape = 'u32[]', space=smem, size = 0x4, offset = 0x4, fixed_abs, tag = 'smem constant byte address 0x4 - core index']
  #allocation1 [shape = 'u32[144,128]{1,0:T(1,128)}', space=vmem, size = 0x12000, scoped, tag = 'internal scratch']
  %s0 = inlined_call_operand.hbm [shape: bf16[8,8,32], index: 0, kind: input, shape index: {}]
  %s1 = inlined_call_operand.hbm [shape: f32[8,8], index: 1, kind: input, shape index: {}]
  %s2 = inlined_call_operand.hbm [shape: bf16[32,128], index: 2, kind: input, shape index: {}]
  %s3 = inlined_call_operand.vmem [shape: f32[1,128], index: 3, kind: input, shape index: {}]
  %s4 = inlined_call_operand.hbm [shape: f32[8,128], index: 4, kind: output, shape index: {}]
  %s5 = sld [smem:[#allocation0]]
  $region38: #{tpu_custom_call.1} parent=0
    _
  %s7 = ssub.s32 1, %s5
  %s8 = scalar_select 0, %s7, %s5
  $region1: #{tpu_custom_call.1} parent=0
    #allocation2 [shape = 'u8[16384]{0}', space=vmem, size = 0x4000, scoped, tag = 'input window, operand 0, single buffered']
    #allocation3 [shape = 's32[1]{0}', space=sflag, size = 0x4, scoped, tag = 'scoped memory for tpu_custom_call.1']
    #allocation4 [shape = 's32[1]{0}', space=sflag, size = 0x4, scoped, tag = 'scoped memory for tpu_custom_call.1']
    #allocation5 [shape = 'u8[4096]{0}', space=vmem, size = 0x1000, scoped, tag = 'input window, operand 1, single buffered']
    #allocation6 [shape = 's32[1]{0}', space=sflag, size = 0x4, scoped, tag = 'scoped memory for tpu_custom_call.1']
    #allocation7 [shape = 'u8[8192]{0}', space=vmem, size = 0x2000, scoped, tag = 'input window, operand 2, single buffered']
    #allocation8 [shape = 'u8[4096]{0}', space=vmem, size = 0x1000, scoped, tag = 'output window, operand 0, single buffered']
    %9 = vsyncpa [#allocation3], 0
    %10 = vsyncpa [#allocation6], 0
    %11 = vsyncpa [#allocation4], 0
    // Predicated region
    $region2: #{tpu_custom_call.1} parent=1 // pred_check
      _
    $region3: #{tpu_custom_call.1} parent=1 // pred_check_branch
      %13 = sbr.rel (0) target = $region5
    $region4: #{tpu_custom_call.1} parent=1 // pred_region
      %s15 = ssub.s32 512, 512
      %16 = vsyncadd [#allocation3], %s15
      %s17 = sshll.u32 [#allocation2], 4
      %s18 = int_to_ptr.vmem [resolvable:$true] %s17
      %23 = dma.hbm_to_vmem [thread:$0]  %s0, 512, %s18, [#allocation3], 64, 64, 4
    $region5: #{tpu_custom_call.1} parent=1 // pred_fallthru
      _
    // Predicated region
    $region6: #{tpu_custom_call.1} parent=1 // pred_check
      _
    $region7: #{tpu_custom_call.1} parent=1 // pred_check_branch
      %25 = sbr.rel (0) target = $region9
    $region8: #{tpu_custom_call.1} parent=1 // pred_region
      %s27 = ssub.s32 128, 128
      %28 = vsyncadd [#allocation6], %s27
      %s30 = sshll.u32 [#allocation5], 4
      %s31 = int_to_ptr.vmem [resolvable:$true] %s30
      %33 = dma.hbm_to_vmem [thread:$0]  %s1, 128, %s31, [#allocation6]
    $region9: #{tpu_custom_call.1} parent=1 // pred_fallthru
      _
    // Predicated region
    $region10: #{tpu_custom_call.1} parent=1 // pred_check
      _
    $region11: #{tpu_custom_call.1} parent=1 // pred_check_branch
      %35 = sbr.rel (0) target = $region13
    $region12: #{tpu_custom_call.1} parent=1 // pred_region
      %s37 = ssub.s32 256, 256
      %38 = vsyncadd [#allocation6], %s37
      %s39 = sshll.u32 [#allocation7], 4
      %s40 = int_to_ptr.vmem [resolvable:$true] %s39
      %45 = dma.hbm_to_vmem [thread:$0]  %s2, 256, %s40, [#allocation6], 64, 64, 4
    $region13: #{tpu_custom_call.1} parent=1 // pred_fallthru
      _
    // Predicated region
    $region14: #{tpu_custom_call.1} parent=1 // pred_check
      _
    $region15: #{tpu_custom_call.1} parent=1 // pred_check_branch
      %47 = sbr.rel (0) target = $region17
    $region16: #{tpu_custom_call.1} parent=1 // pred_region
      _
    $region17: #{tpu_custom_call.1} parent=1 // pred_fallthru
      _
    // Predicated region
    $region18: #{tpu_custom_call.1} parent=1 // pred_check
      _
    $region19: #{tpu_custom_call.1} parent=1 // pred_check_branch
      %49 = sbr.rel (0) target = $region21
    $region20: #{tpu_custom_call.1} parent=1 // pred_region
      %50 = dma.done [#allocation3], 512
    $region21: #{tpu_custom_call.1} parent=1 // pred_fallthru
      _
    // Predicated region
    $region22: #{tpu_custom_call.1} parent=1 // pred_check
      _
    $region23: #{tpu_custom_call.1} parent=1 // pred_check_branch
      %52 = sbr.rel (0) target = $region25
    $region24: #{tpu_custom_call.1} parent=1 // pred_region
      %53 = dma.done [#allocation6], 128
    $region25: #{tpu_custom_call.1} parent=1 // pred_fallthru
      _
    // Predicated region
    $region26: #{tpu_custom_call.1} parent=1 // pred_check
      _
    $region27: #{tpu_custom_call.1} parent=1 // pred_check_branch
      %55 = sbr.rel (0) target = $region29
    $region28: #{tpu_custom_call.1} parent=1 // pred_region
      %56 = dma.done [#allocation6], 256
    $region29: #{tpu_custom_call.1} parent=1 // pred_fallthru
      _
    %v58 = vld [vmem:[#allocation2] sm:$0xf]
    %v59 = vld [vmem:[#allocation2 + $0x4] sm:$0xf]
    %v60 = vld [vmem:[#allocation2 + $0x8] sm:$0xf]
    %v61 = vld [vmem:[#allocation2 + $0xc] sm:$0xf]
    %v62 = vld [vmem:[#allocation2 + $0x10] sm:$0xf]
    %v63 = vld [vmem:[#allocation2 + $0x14] sm:$0xf]
    %v64 = vld [vmem:[#allocation2 + $0x18] sm:$0xf]
    %v65 = vld [vmem:[#allocation2 + $0x1c] sm:$0xf]
    %v66 = vld [vmem:[#allocation7] sm:$0xf]
    %v67 = vld [vmem:[#allocation7 + $0x4] sm:$0xf]
    %v68 = vld [vmem:[#allocation7 + $0x8] sm:$0xf]
    %v69 = vld [vmem:[#allocation7 + $0xc] sm:$0xf]
    %v70 = vld [vmem:[%s3] sm:$0x1]
    %v72 = vlaneseq
    %v73 = vshrl.u32 %v72, 7
    %v74 = vsub.s32 0, %v73
    %v75 = vrot.slane %v70, %v74
    %v85 = vunpack.c.l.b16 %v58
    %v86 = vunpack.c.l.b16 %v59
    %v87 = vunpack.c.l.b16 %v60
    %v88 = vunpack.c.l.b16 %v61
    %v89 = vunpack.c.l.b16 %v62
    %v90 = vunpack.c.l.b16 %v63
    %v91 = vunpack.c.l.b16 %v64
    %v92 = vunpack.c.l.b16 %v65
    %v93 = vpack.c.b16 %v86, %v85
    %v94 = vpack.c.b16 %v88, %v87
    %v95 = vpack.c.b16 %v90, %v89
    %v96 = vpack.c.b16 %v92, %v91
    %v101 = vunpack.c.l.b16 %v66
    %v102 = vunpack.c.l.b16 %v67
    %v103 = vunpack.c.l.b16 %v68
    %v104 = vunpack.c.l.b16 %v69
    %v105 = vpack.c.b16 %v102, %v101
    %v106 = vpack.c.b16 %v104, %v103
    %vm109 = vcmask 261120
    %v111 = vsel %vm109, %v93, 0
    %v114 = vsel %vm109, %v94, 0
    %v117 = vsel %vm109, %v95, 0
    %v120 = vsel %vm109, %v96, 0
    %122 = vmatprep.subr.bf16.mxu0 0
    %123 = vmatpush1.bf16.msra.mxu0 0
    %124 = vmatprep.subr.bf16.mxu0 0
    %125 = vmatpush1.bf16.msra.mxu0 0
    %126 = vmatprep.subr.bf16.mxu0 0
    %127 = vmatpush1.bf16.msra.mxu0 0
    %128 = vmatprep.subr.bf16.mxu0 0
    %129 = vmatpush1.bf16.msra.mxu0 0
    %130 = vmatprep.subr.bf16.mxu0 0
    %131 = vmatpush1.bf16.msra.mxu0 0
    %132 = vmatprep.subr.bf16.mxu0 0
    %133 = vmatpush1.bf16.msra.mxu0 0
    %134 = vmatprep.subr.bf16.mxu0 0
    %135 = vmatpush1.bf16.msra.mxu0 %v106
    %136 = vmatprep.subr.bf16.mxu0 0
    %137 = vmatpush1.bf16.msra.mxu0 %v105
    %138 = vmatprep.subr.bf16.mxu0 0
    %139 = vmatpush2.bf16.msra.mxu0 0
    %140 = vmatprep.subr.bf16.mxu0 0
    %141 = vmatpush2.bf16.msra.mxu0 0
    %142 = vmatprep.subr.bf16.mxu0 0
    %143 = vmatpush2.bf16.msra.mxu0 0
    %144 = vmatprep.subr.bf16.mxu0 0
    %145 = vmatpush2.bf16.msra.mxu0 0
    %146 = vmatprep.subr.bf16.mxu0 0
    %147 = vmatpush2.bf16.msra.mxu0 0
    %148 = vmatprep.subr.bf16.mxu0 0
    %149 = vmatpush2.bf16.msra.mxu0 0
    %150 = vmatprep.subr.bf16.mxu0 0
    %151 = vmatpush2.bf16.msra.mxu0 0
    %152 = vmatprep.subr.bf16.mxu0 0
    %153 = vmatpush2.bf16.msra.mxu0 0
    %154 = vmatprep.mubr.bf16.mxu0 0
    %155 = vmatmul.mubr.bf16.gmra.mxu0 %v111
    %v156 = vpop.f32.mrf.mxu0
    %v157 = vadd.f32 %v75, %v156
    %v158 = vpop.f32.mrf.mxu0
    %v159 = vpop.f32.mrf.mxu0
    %v160 = vadd.f32 %v75, %v159
    %v161 = vpop.f32.mrf.mxu0
    %162 = vmatprep.mubr.bf16.mxu0 0
    %163 = vmatmul.mubr.bf16.gmra.mxu0 %v114
    %v164 = vpop.f32.mrf.mxu0
    %v165 = vadd.f32 %v75, %v164
    %v166 = vpop.f32.mrf.mxu0
    %v167 = vpop.f32.mrf.mxu0
    %v168 = vadd.f32 %v75, %v167
    %v169 = vpop.f32.mrf.mxu0
    %170 = vmatprep.mubr.bf16.mxu0 0
    %171 = vmatmul.mubr.bf16.gmra.mxu0 %v117
    %v172 = vpop.f32.mrf.mxu0
    %v173 = vadd.f32 %v75, %v172
    %v174 = vpop.f32.mrf.mxu0
    %v175 = vpop.f32.mrf.mxu0
    %v176 = vadd.f32 %v75, %v175
    %v177 = vpop.f32.mrf.mxu0
    %178 = vmatprep.mubr.bf16.mxu0 0
    %179 = vmatmul.mubr.bf16.gmra.mxu0 %v120
    %v180 = vpop.f32.mrf.mxu0
    %v181 = vadd.f32 %v75, %v180
    %v182 = vpop.f32.mrf.mxu0
    %v183 = vpop.f32.mrf.mxu0
    %v184 = vadd.f32 %v75, %v183
    %v185 = vpop.f32.mrf.mxu0
    %186 = vdwg.mxu0
    %v187 = vmul.f32 %v157, %v157
    %v188 = vmul.f32 %v160, %v160
    %v189 = vmul.f32 %v165, %v165
    %v190 = vmul.f32 %v168, %v168
    %v191 = vmul.f32 %v173, %v173
    %v192 = vmul.f32 %v176, %v176
    %v193 = vmul.f32 %v181, %v181
    %v194 = vmul.f32 %v184, %v184
    %v195 = vmul.f32 %v157, %v187
    %v196 = vmul.f32 %v160, %v188
    %v197 = vmul.f32 %v165, %v189
    %v198 = vmul.f32 %v168, %v190
    %v199 = vmul.f32 %v173, %v191
    %v200 = vmul.f32 %v176, %v192
    %v201 = vmul.f32 %v181, %v193
    %v202 = vmul.f32 %v184, %v194
    %v203 = vmul.f32 %v195, 0.044715
    %v204 = vmul.f32 %v196, 0.044715
    %v205 = vmul.f32 %v197, 0.044715
    %v206 = vmul.f32 %v198, 0.044715
    %v207 = vmul.f32 %v199, 0.044715
    %v208 = vmul.f32 %v200, 0.044715
    %v209 = vmul.f32 %v201, 0.044715
    %v210 = vmul.f32 %v202, 0.044715
    %v211 = vadd.f32 %v157, %v203
    %v212 = vadd.f32 %v160, %v204
    %v213 = vadd.f32 %v165, %v205
    %v214 = vadd.f32 %v168, %v206
    %v215 = vadd.f32 %v173, %v207
    %v216 = vadd.f32 %v176, %v208
    %v217 = vadd.f32 %v181, %v209
    %v218 = vadd.f32 %v184, %v210
    %v219 = vmul.f32 %v211, 0.7978846
    %v220 = vmul.f32 %v212, 0.7978846
    %v221 = vmul.f32 %v213, 0.7978846
    %v222 = vmul.f32 %v214, 0.7978846
    %v223 = vmul.f32 %v215, 0.7978846
    %v224 = vmul.f32 %v216, 0.7978846
    %v225 = vmul.f32 %v217, 0.7978846
    %v226 = vmul.f32 %v218, 0.7978846
    %v227 = vtanh.pop %v219
    %v228 = vtanh.pop %v220
    %v229 = vtanh.pop %v221
    %v230 = vtanh.pop %v222
    %v231 = vtanh.pop %v223
    %v232 = vtanh.pop %v224
    %v233 = vtanh.pop %v225
    %v234 = vtanh.pop %v226
    %v235 = vadd.f32 %v227, 1.0
    %v236 = vadd.f32 %v228, 1.0
    %v237 = vadd.f32 %v229, 1.0
    %v238 = vadd.f32 %v230, 1.0
    %v239 = vadd.f32 %v231, 1.0
    %v240 = vadd.f32 %v232, 1.0
    %v241 = vadd.f32 %v233, 1.0
    %v242 = vadd.f32 %v234, 1.0
    %v243 = vmul.f32 %v235, 0.5
    %v244 = vmul.f32 %v236, 0.5
    %v245 = vmul.f32 %v237, 0.5
    %v246 = vmul.f32 %v238, 0.5
    %v247 = vmul.f32 %v239, 0.5
    %v248 = vmul.f32 %v240, 0.5
    %v249 = vmul.f32 %v241, 0.5
    %v250 = vmul.f32 %v242, 0.5
    %v251 = vmul.f32 %v157, %v243
    %v252 = vmul.f32 %v160, %v244
    %v253 = vmul.f32 %v165, %v245
    %v254 = vmul.f32 %v168, %v246
    %v255 = vmul.f32 %v173, %v247
    %v256 = vmul.f32 %v176, %v248
    %v257 = vmul.f32 %v181, %v249
    %v258 = vmul.f32 %v184, %v250
    %v259 = vld [vmem:[#allocation5] sm:$0xff]
    %v260 = vlaneseq
    %v261 = vshrl.u32 %v260, 7
    %v262 = vsub.s32 0, %v261
    %v263 = vrot.slane %v259, %v262
    %265 = vbcast.lane.b32.xlu0 %v263, 256
    %v266 = vpop.permute.xlu0 %265
    %v267 = vlaneseq
    %v268 = vshrl.u32 %v267, 7
    %v269 = vsub.s32 1, %v268
    %v270 = vrot.slane %v259, %v269
    %272 = vbcast.lane.b32.xlu0 %v270, 256
    %v273 = vpop.permute.xlu0 %272
    %v274 = vlaneseq
    %v275 = vshrl.u32 %v274, 7
    %v276 = vsub.s32 2, %v275
    %v277 = vrot.slane %v259, %v276
    %279 = vbcast.lane.b32.xlu0 %v277, 256
    %v280 = vpop.permute.xlu0 %279
    %v281 = vlaneseq
    %v282 = vshrl.u32 %v281, 7
    %v283 = vsub.s32 3, %v282
    %v284 = vrot.slane %v259, %v283
    %286 = vbcast.lane.b32.xlu0 %v284, 256
    %v287 = vpop.permute.xlu0 %286
    %v288 = vlaneseq
    %v289 = vshrl.u32 %v288, 7
    %v290 = vsub.s32 4, %v289
    %v291 = vrot.slane %v259, %v290
    %293 = vbcast.lane.b32.xlu0 %v291, 256
    %v294 = vpop.permute.xlu0 %293
    %v295 = vlaneseq
    %v296 = vshrl.u32 %v295, 7
    %v297 = vsub.s32 5, %v296
    %v298 = vrot.slane %v259, %v297
    %300 = vbcast.lane.b32.xlu0 %v298, 256
    %v301 = vpop.permute.xlu0 %300
    %v302 = vlaneseq
    %v303 = vshrl.u32 %v302, 7
    %v304 = vsub.s32 6, %v303
    %v305 = vrot.slane %v259, %v304
    %307 = vbcast.lane.b32.xlu0 %v305, 256
    %v308 = vpop.permute.xlu0 %307
    %v309 = vlaneseq
    %v310 = vshrl.u32 %v309, 7
    %v311 = vsub.s32 7, %v310
    %v312 = vrot.slane %v259, %v311
    %314 = vbcast.lane.b32.xlu0 %v312, 256
    %v315 = vpop.permute.xlu0 %314
    %v316 = vmul.f32 %v251, %v266
    %v317 = vmul.f32 %v252, %v273
    %v318 = vmul.f32 %v253, %v280
    %v319 = vmul.f32 %v254, %v287
    %v320 = vmul.f32 %v255, %v294
    %v321 = vmul.f32 %v256, %v301
    %v322 = vmul.f32 %v257, %v308
    %v323 = vmul.f32 %v258, %v315
    %v324 = vrot.slane %v316, 4
    %v325 = vadd.f32 %v316, %v324
    %v326 = vrot.slane %v325, 2
    %v327 = vadd.f32 %v325, %v326
    %v328 = vrot.slane %v327, 1
    %v329 = vadd.f32 %v327, %v328
    %v330 = vrot.slane %v317, 4
    %v331 = vadd.f32 %v317, %v330
    %v332 = vrot.slane %v331, 2
    %v333 = vadd.f32 %v331, %v332
    %v334 = vrot.slane %v333, 1
    %v335 = vadd.f32 %v333, %v334
    %v336 = vrot.slane %v318, 4
    %v337 = vadd.f32 %v318, %v336
    %v338 = vrot.slane %v337, 2
    %v339 = vadd.f32 %v337, %v338
    %v340 = vrot.slane %v339, 1
    %v341 = vadd.f32 %v339, %v340
    %v342 = vrot.slane %v319, 4
    %v343 = vadd.f32 %v319, %v342
    %v344 = vrot.slane %v343, 2
    %v345 = vadd.f32 %v343, %v344
    %v346 = vrot.slane %v345, 1
    %v347 = vadd.f32 %v345, %v346
    %v348 = vrot.slane %v320, 4
    %v349 = vadd.f32 %v320, %v348
    %v350 = vrot.slane %v349, 2
    %v351 = vadd.f32 %v349, %v350
    %v352 = vrot.slane %v351, 1
    %v353 = vadd.f32 %v351, %v352
    %v354 = vrot.slane %v321, 4
    %v355 = vadd.f32 %v321, %v354
    %v356 = vrot.slane %v355, 2
    %v357 = vadd.f32 %v355, %v356
    %v358 = vrot.slane %v357, 1
    %v359 = vadd.f32 %v357, %v358
    %v360 = vrot.slane %v322, 4
    %v361 = vadd.f32 %v322, %v360
    %v362 = vrot.slane %v361, 2
    %v363 = vadd.f32 %v361, %v362
    %v364 = vrot.slane %v363, 1
    %v365 = vadd.f32 %v363, %v364
    %v366 = vrot.slane %v323, 4
    %v367 = vadd.f32 %v323, %v366
    %v368 = vrot.slane %v367, 2
    %v369 = vadd.f32 %v367, %v368
    %v370 = vrot.slane %v369, 1
    %v371 = vadd.f32 %v369, %v370
    %vm372 = vcmask 64512
    %v373 = vsel %vm372, %v259, 0.0
    %374 = vadd.xlane.f32.xlu0 %v373
    %v375 = vpop.xlane.xlu0 %374
    %v376 = vmax.f32 %v375, 1.0
    %v378 = vrot.slane %v376, 1
    %v379 = vrot.slane %v376, 2
    %v380 = vrot.slane %v376, 3
    %v381 = vrot.slane %v376, 4
    %v382 = vrot.slane %v376, 5
    %v383 = vrot.slane %v376, 6
    %v384 = vrot.slane %v376, 7
    %v393 = vrcp.pop %v376
    %v394 = vmul.f32 %v329, %v393
    %v395 = vrcp.pop %v378
    %v396 = vmul.f32 %v335, %v395
    %v397 = vrcp.pop %v379
    %v398 = vmul.f32 %v341, %v397
    %v399 = vrcp.pop %v380
    %v400 = vmul.f32 %v347, %v399
    %v401 = vrcp.pop %v381
    %v402 = vmul.f32 %v353, %v401
    %v403 = vrcp.pop %v382
    %v404 = vmul.f32 %v359, %v403
    %v405 = vrcp.pop %v383
    %v406 = vmul.f32 %v365, %v405
    %v407 = vrcp.pop %v384
    %v408 = vmul.f32 %v371, %v407
    %v417 = vrot.slane %v396, 7
    %vm418 = vcmask 1041409
    %v419 = vsel %vm418, %v417, %v394
    %v420 = vrot.slane %v398, 6
    %vm421 = vcmask 1042434
    %v422 = vsel %vm421, %v420, %v419
    %v423 = vrot.slane %v400, 5
    %vm424 = vcmask 1043459
    %v425 = vsel %vm424, %v423, %v422
    %v426 = vrot.slane %v402, 4
    %vm427 = vcmask 1044484
    %v428 = vsel %vm427, %v426, %v425
    %v429 = vrot.slane %v404, 3
    %vm430 = vcmask 1045509
    %v431 = vsel %vm430, %v429, %v428
    %v432 = vrot.slane %v406, 2
    %vm433 = vcmask 1046534
    %v434 = vsel %vm433, %v432, %v431
    %v435 = vrot.slane %v408, 1
    %vm436 = vcmask 1047559
    %v437 = vsel %vm436, %v435, %v434
    %439 = vst [vmem:[#allocation8] sm:$0xff] %v437
    // Predicated region
    $region30: #{tpu_custom_call.1} parent=1 // pred_check
      _
    $region31: #{tpu_custom_call.1} parent=1 // pred_check_branch
      %441 = sbr.rel (0) target = $region33
    $region32: #{tpu_custom_call.1} parent=1 // pred_region
      %s443 = ssub.s32 128, 128
      %444 = vsyncadd [#allocation4], %s443
      %s446 = sshll.u32 [#allocation8], 4
      %s447 = int_to_ptr.vmem [resolvable:$true] %s446
      %449 = dma.vmem_to_hbm [thread:$0]  %s447, 128, %s4, [#allocation4]
    $region33: #{tpu_custom_call.1} parent=1 // pred_fallthru
      _
    // Predicated region
    $region34: #{tpu_custom_call.1} parent=1 // pred_check
      _
    $region35: #{tpu_custom_call.1} parent=1 // pred_check_branch
      %451 = sbr.rel (0) target = $region37
    $region36: #{tpu_custom_call.1} parent=1 // pred_region
      %452 = dma.done [#allocation4], 128
    $region37: #{tpu_custom_call.1} parent=1 // pred_fallthru
      _
    %453 = vsyncpa [#allocation3], 1
    %454 = vsyncpa [#allocation6], 1
    %455 = vsyncpa [#allocation4], 1

</llo_original>
